<compile_context>
chip_gen: v5e
topology: v5e:2x2
jax: 0.10.0
libtpu: 0.0.40
codegen_flags: <defaults>
</compile_context>

<pallas_src>
import functools
import math

import jax
import jax.numpy as jnp
from jax.experimental import pallas as pl
from jax.experimental.pallas import tpu as pltpu

_POS = 3      # position channels
_DF = 16      # n_feature
_PACK = 8     # nodes packed per wide row: 8 * 16 features = 128 lanes


# ------------------------------------------------------------------
# Kernel: one grid step = `tm` tree nodes, both children, full 3-layer MLP.
# All activations use the lane-dense "wide" layout described above.
# ------------------------------------------------------------------
def encoder_kernel(xl_ref, fl_ref, xr_ref, fr_ref,
                   w1x_ref, wstk_ref, b_ref, o_ref):
    cdt = w1x_ref.dtype  # bf16 compute dtype for the MXU

    # Stack left|right along the row axis -> a single matmul chain per layer.
    xw = jnp.concatenate([xl_ref[...], xr_ref[...]], axis=0).astype(cdt)  # (2G, 24)
    fw = jnp.concatenate([fl_ref[...], fr_ref[...]], axis=0).astype(cdt)  # (2G, 128)

    b1 = b_ref[0:1, :]   # (1, 128) f32, already tiled 8x along lanes
    b2 = b_ref[1:2, :]
    b3 = b_ref[2:3, :]

    # Layer 1:  X @ W1x + F @ W1f + b1   (split W1 replaces the HBM concat)
    h = (jnp.dot(xw, w1x_ref[...], preferred_element_type=jnp.float32)
         + jnp.dot(fw, wstk_ref[0], preferred_element_type=jnp.float32)
         + b1)
    h = jnp.maximum(h, 0.0)
    # Layer 2
    h = jnp.dot(h.astype(cdt), wstk_ref[1], preferred_element_type=jnp.float32) + b2
    h = jnp.maximum(h, 0.0)
    # Layer 3 (no ReLU: doLastRelu=False)
    y = jnp.dot(h.astype(cdt), wstk_ref[2], preferred_element_type=jnp.float32) + b3

    g = o_ref.shape[0]
    o_ref[...] = (y[:g, :] + y[g:, :]).astype(o_ref.dtype)  # left + right


# ------------------------------------------------------------------
# Wrapper
# ------------------------------------------------------------------
def _round_up(x, m):
    return -(-x // m) * m


def _choose_tm(n_rows):
    # Big row tiles amortize the ~0.35us/step grid overhead; aim for ~N/2 per
    # step (>=2 steps lets the "parallel" axis shard across v7x's 2 TCs),
    # capped at 8192 rows and rounded to 64 so tm//8 is sublane-aligned.
    target = min(8192, max(64, _round_up(n_rows, 2) // 2))
    return _round_up(target, 64)


@functools.partial(jax.jit, static_argnames=("tm",))
def encoder_forward(X_left, X_right, F_left, F_right, packed_params, *, tm=None):
    """Pallas implementation of Encoder.forward.

    Inputs may be f32 or bf16; bf16 is preferred (halves HBM->kernel bytes).
    `packed_params` comes from `pack_params(...)`.
    """
    w1x_bd, w_stack, b_stack = packed_params
    N, p = X_left.shape
    Nf, d = F_left.shape
    assert p == _POS and d == _DF and Nf == N, \
        "wide layout assumes 3 position dims and 16 features"

    if tm is None:
        tm = _choose_tm(N)
    assert tm % (8 * _PACK) == 0, "tm must be a multiple of 64"
    Np = _round_up(max(N, 1), tm)
    G = tm // _PACK                      # wide rows per grid step
    grid = (Np // tm,)

    def widen(a, width):
        # Pad rows to the tile multiple, then a free row-major reshape that
        # packs 8 consecutive nodes along the 128-lane axis.
        if Np != N:
            a = jnp.pad(a, ((0, Np - N), (0, 0)))
        return a.reshape(Np // _PACK, width * _PACK)

    xl = widen(X_left, _POS)
    xr = widen(X_right, _POS)
    fl = widen(F_left, _DF)
    fr = widen(F_right, _DF)

    x_spec = pl.BlockSpec((G, _POS * _PACK), lambda i: (i, 0))
    f_spec = pl.BlockSpec((G, _DF * _PACK), lambda i: (i, 0))
    o_spec = pl.BlockSpec((G, _DF * _PACK), lambda i: (i, 0))

    def const(shape):
        return pl.BlockSpec(shape, lambda i: (0,) * len(shape))

    out_wide = pl.pallas_call(
        encoder_kernel,
        out_shape=jax.ShapeDtypeStruct((Np // _PACK, _DF * _PACK), jnp.float32),
        grid_spec=pltpu.PrefetchScalarGridSpec(
            num_scalar_prefetch=0,
            grid=grid,
            in_specs=[
                x_spec, f_spec, x_spec, f_spec,
                const(w1x_bd.shape), const(w_stack.shape), const(b_stack.shape),
            ],
            out_specs=o_spec,
        ),
        compiler_params=pltpu.CompilerParams(
            dimension_semantics=("parallel",),
            vmem_limit_bytes=32 * 1024 * 1024,   # headroom on v5e's 16 MiB default
        ),
    )(xl, fl, xr, fr, w1x_bd, w_stack, b_stack)

    # Free contiguous reshape back to (Np, 16), then drop padded rows.
    return out_wide.reshape(Np, _DF)[:N]


# ------------------------------------------------------------------
# Parameter init (mirrors nn.Linear + xavier_uniform, gain=sqrt(2)) & packing
# ------------------------------------------------------------------
def init_linear(key, din, dout):
    kw, kb = jax.random.split(key)
    gain = math.sqrt(2.0)
    bound_w = gain * math.sqrt(6.0 / (din + dout))
    # stored as (in, out) so the math is x @ W + b  (== PyTorch x @ W.T + b)
    w = jax.random.uniform(kw, (din, dout), jnp.float32, -bound_w, bound_w)
    bound_b = 1.0 / math.sqrt(din)
    b = jax.random.uniform(kb, (1, dout), jnp.float32, -bound_b, bound_b)
    return w, b


def init_encoder_params(key, n_feature=16, in_channel=16 + 3):
    k1, k2, k3 = jax.random.split(key, 3)
    w1, b1 = init_linear(k1, in_channel, n_feature)
    w2, b2 = init_linear(k2, n_feature, n_feature)
    w3, b3 = init_linear(k3, n_feature, n_feature)
    return (w1, b1, w2, b2, w3, b3)


def pack_params(params, compute_dtype=jnp.bfloat16):
    """Pack the logical MLP params into lane-dense kernel operands.

    W1 is split (position rows vs feature rows); each (k,16) weight becomes an
    8-way block-diagonal (8k, 128) slab so a wide row of 8 packed nodes is
    transformed by one dense matmul.  Biases are tiled 8x along lanes.
    """
    w1, b1, w2, b2, w3, b3 = params
    w1x, w1f = w1[:_POS], w1[_POS:]

    def bd(w):
        return jax.scipy.linalg.block_diag(*([w] * _PACK))

    w1x_bd = bd(w1x).astype(compute_dtype)                                 # (24, 128)
    w_stack = jnp.stack([bd(w1f), bd(w2), bd(w3)]).astype(compute_dtype)   # (3, 128, 128)
    b_stack = jnp.concatenate(
        [jnp.tile(b, (1, _PACK)) for b in (b1, b2, b3)], axis=0
    ).astype(jnp.float32)                                                  # (3, 128)
    return w1x_bd, w_stack, b_stack


# ------------------------------------------------------------------
# Pure-JAX reference (compute_dtype mirrors the kernel's bf16 rounding points)
# ------------------------------------------------------------------
def encoder_ref(X_left, X_right, F_left, F_right, params,
                compute_dtype=jnp.float32):
    w1, b1, w2, b2, w3, b3 = params

    def q(a):
        return a.astype(compute_dtype).astype(jnp.float32)

    w1q, w2q, w3q = q(w1), q(w2), q(w3)

    def mlp(x, f):
        h = q(x) @ w1q[:_POS] + q(f) @ w1q[_POS:] + b1
        h = q(jnp.maximum(h, 0.0))
        h = q(jnp.maximum(h @ w2q + b2, 0.0))
        return h @ w3q + b3

    return mlp(X_left, F_left) + mlp(X_right, F_right)


if __name__ == "__main__":
    n_feature = 16
    N = 200   # not a tile multiple -> exercises padding and a 2-step grid

    key = jax.random.PRNGKey(0)
    kp, k1, k2, k3, k4 = jax.random.split(key, 5)

    params = init_encoder_params(kp, n_feature=n_feature, in_channel=n_feature + 3)
    packed = pack_params(params)   # bf16 block-diagonal weight slabs, f32 biases

    X_left = jax.random.normal(k1, (N, 3), jnp.float32)
    X_right = jax.random.normal(k2, (N, 3), jnp.float32)
    F_left = jax.random.normal(k3, (N, n_feature), jnp.float32)
    F_right = jax.random.normal(k4, (N, n_feature), jnp.float32)

    # bf16 transport of the activations (callers should supply bf16 so the
    # HBM->kernel path moves half the bytes; f32 inputs also work).
    Xl, Xr, Fl, Fr = (a.astype(jnp.bfloat16)
                      for a in (X_left, X_right, F_left, F_right))

    out = encoder_forward(Xl, Xr, Fl, Fr, packed)
    out = jax.block_until_ready(out)
    assert out.shape == (N, n_feature)
    assert out.dtype == jnp.float32

    # Reference with bf16 rounding at the same points as the kernel.
    ref_bf16 = encoder_ref(Xl, Xr, Fl, Fr, params, compute_dtype=jnp.bfloat16)
    assert jnp.allclose(out, ref_bf16, atol=1e-2, rtol=1e-2), \
        "mismatch vs precision-mirrored reference"

    # Loose sanity check vs full-f32 PyTorch-equivalent math (bf16 transport
    # introduces ~1% relative error, as expected).
    ref_f32 = encoder_ref(X_left, X_right, F_left, F_right, params)
    assert jnp.allclose(out, ref_f32, atol=2e-1, rtol=5e-2), \
        "mismatch vs f32 reference"

    print("KERNEL_OK")
</pallas_src>

<mosaic_0001>
module attributes {stable_mosaic.version = 11 : i64} {
  func.func @encoder_kernel(%arg0: i32, %arg1: memref<16x24xbf16, #tpu.memory_space<vmem>>, %arg2: memref<16x128xbf16, #tpu.memory_space<vmem>>, %arg3: memref<16x24xbf16, #tpu.memory_space<vmem>>, %arg4: memref<16x128xbf16, #tpu.memory_space<vmem>>, %arg5: memref<24x128xbf16, #tpu.memory_space<vmem>>, %arg6: memref<3x128x128xbf16, #tpu.memory_space<vmem>>, %arg7: memref<3x128xf32, #tpu.memory_space<vmem>>, %arg8: memref<16x128xf32, #tpu.memory_space<vmem>>) attributes {dimension_semantics = [#tpu.dimension_semantics<parallel>], iteration_bounds = array<i64: 2>, scalar_prefetch = 0 : i64, scratch_operands = 0 : i64, tpu.core_type = #tpu.core_type<tc>, window_params = [{transform_indices = @transform_0, window_bounds = array<i64: 16, 24>}, {transform_indices = @transform_1, window_bounds = array<i64: 16, 128>}, {transform_indices = @transform_2, window_bounds = array<i64: 16, 24>}, {transform_indices = @transform_3, window_bounds = array<i64: 16, 128>}, {pipeline_mode = #tpu.pipeline_mode<synchronous>, transform_indices = @transform_4, window_bounds = array<i64: 24, 128>}, {pipeline_mode = #tpu.pipeline_mode<synchronous>, transform_indices = @transform_5, window_bounds = array<i64: 3, 128, 128>}, {pipeline_mode = #tpu.pipeline_mode<synchronous>, transform_indices = @transform_6, window_bounds = array<i64: 3, 128>}, {transform_indices = @transform_7, window_bounds = array<i64: 16, 128>}]} {
    %c0 = arith.constant 0 : index
    %c0_0 = arith.constant 0 : index
    %0 = vector.load %arg1[%c0, %c0_0] : memref<16x24xbf16, #tpu.memory_space<vmem>>, vector<16x24xbf16>
    %c0_1 = arith.constant 0 : index
    %c0_2 = arith.constant 0 : index
    %1 = vector.load %arg3[%c0_1, %c0_2] : memref<16x24xbf16, #tpu.memory_space<vmem>>, vector<16x24xbf16>
    %2 = tpu.concatenate %0, %1 in 0 : vector<16x24xbf16>, vector<16x24xbf16> -> vector<32x24xbf16>
    %c0_3 = arith.constant 0 : index
    %c0_4 = arith.constant 0 : index
    %3 = vector.load %arg2[%c0_3, %c0_4] : memref<16x128xbf16, #tpu.memory_space<vmem>>, vector<16x128xbf16>
    %c0_5 = arith.constant 0 : index
    %c0_6 = arith.constant 0 : index
    %4 = vector.load %arg4[%c0_5, %c0_6] : memref<16x128xbf16, #tpu.memory_space<vmem>>, vector<16x128xbf16>
    %5 = tpu.concatenate %3, %4 in 0 : vector<16x128xbf16>, vector<16x128xbf16> -> vector<32x128xbf16>
    %c0_7 = arith.constant 0 : index
    %c0_8 = arith.constant 0 : index
    %6 = vector.load %arg7[%c0_7, %c0_8] : memref<3x128xf32, #tpu.memory_space<vmem>>, vector<1x128xf32>
    %c1 = arith.constant 1 : index
    %c0_9 = arith.constant 0 : index
    %7 = vector.load %arg7[%c1, %c0_9] : memref<3x128xf32, #tpu.memory_space<vmem>>, vector<1x128xf32>
    %c2 = arith.constant 2 : index
    %c0_10 = arith.constant 0 : index
    %8 = vector.load %arg7[%c2, %c0_10] : memref<3x128xf32, #tpu.memory_space<vmem>>, vector<1x128xf32>
    %c0_11 = arith.constant 0 : index
    %c0_12 = arith.constant 0 : index
    %9 = vector.load %arg5[%c0_11, %c0_12] : memref<24x128xbf16, #tpu.memory_space<vmem>>, vector<24x128xbf16>
    %cst = arith.constant dense<0.000000e+00> : vector<32x128xf32>
    %10 = tpu.matmul %2, %9, %cst {dimension_numbers = #tpu.dot_dimension_numbers<[1], [0], [0], [1], [0, 0, 1, 1], [], []>} : vector<32x24xbf16>, vector<24x128xbf16>, vector<32x128xf32> -> vector<32x128xf32>
    %c0_13 = arith.constant 0 : index
    %c0_14 = arith.constant 0 : index
    %c0_15 = arith.constant 0 : index
    %11 = vector.load %arg6[%c0_13, %c0_14, %c0_15] : memref<3x128x128xbf16, #tpu.memory_space<vmem>>, vector<1x128x128xbf16>
    %12 = vector.shape_cast %11 : vector<1x128x128xbf16> to vector<128x128xbf16>
    %cst_16 = arith.constant dense<0.000000e+00> : vector<32x128xf32>
    %13 = tpu.matmul %5, %12, %cst_16 {dimension_numbers = #tpu.dot_dimension_numbers<[1], [0], [0], [1], [0, 0, 1, 1], [], []>} : vector<32x128xbf16>, vector<128x128xbf16>, vector<32x128xf32> -> vector<32x128xf32>
    %14 = arith.addf %10, %13 : vector<32x128xf32>
    %15 = vector.broadcast %6 : vector<1x128xf32> to vector<32x128xf32>
    %16 = arith.addf %14, %15 : vector<32x128xf32>
    %cst_17 = arith.constant 0.000000e+00 : f32
    %17 = vector.broadcast %cst_17 : f32 to vector<32x128xf32>
    %18 = arith.maximumf %16, %17 : vector<32x128xf32>
    %19 = arith.truncf %18 : vector<32x128xf32> to vector<32x128xbf16>
    %c1_18 = arith.constant 1 : index
    %c0_19 = arith.constant 0 : index
    %c0_20 = arith.constant 0 : index
    %20 = vector.load %arg6[%c1_18, %c0_19, %c0_20] : memref<3x128x128xbf16, #tpu.memory_space<vmem>>, vector<1x128x128xbf16>
    %21 = vector.shape_cast %20 : vector<1x128x128xbf16> to vector<128x128xbf16>
    %cst_21 = arith.constant dense<0.000000e+00> : vector<32x128xf32>
    %22 = tpu.matmul %19, %21, %cst_21 {dimension_numbers = #tpu.dot_dimension_numbers<[1], [0], [0], [1], [0, 0, 1, 1], [], []>} : vector<32x128xbf16>, vector<128x128xbf16>, vector<32x128xf32> -> vector<32x128xf32>
    %23 = vector.broadcast %7 : vector<1x128xf32> to vector<32x128xf32>
    %24 = arith.addf %22, %23 : vector<32x128xf32>
    %cst_22 = arith.constant 0.000000e+00 : f32
    %25 = vector.broadcast %cst_22 : f32 to vector<32x128xf32>
    %26 = arith.maximumf %24, %25 : vector<32x128xf32>
    %27 = arith.truncf %26 : vector<32x128xf32> to vector<32x128xbf16>
    %c2_23 = arith.constant 2 : index
    %c0_24 = arith.constant 0 : index
    %c0_25 = arith.constant 0 : index
    %28 = vector.load %arg6[%c2_23, %c0_24, %c0_25] : memref<3x128x128xbf16, #tpu.memory_space<vmem>>, vector<1x128x128xbf16>
    %29 = vector.shape_cast %28 : vector<1x128x128xbf16> to vector<128x128xbf16>
    %cst_26 = arith.constant dense<0.000000e+00> : vector<32x128xf32>
    %30 = tpu.matmul %27, %29, %cst_26 {dimension_numbers = #tpu.dot_dimension_numbers<[1], [0], [0], [1], [0, 0, 1, 1], [], []>} : vector<32x128xbf16>, vector<128x128xbf16>, vector<32x128xf32> -> vector<32x128xf32>
    %31 = vector.broadcast %8 : vector<1x128xf32> to vector<32x128xf32>
    %32 = arith.addf %30, %31 : vector<32x128xf32>
    %33 = vector.extract_strided_slice %32 {offsets = [0, 0], sizes = [16, 128], strides = [1, 1]} : vector<32x128xf32> to vector<16x128xf32>
    %34 = vector.extract_strided_slice %32 {offsets = [16, 0], sizes = [16, 128], strides = [1, 1]} : vector<32x128xf32> to vector<16x128xf32>
    %35 = arith.addf %33, %34 : vector<16x128xf32>
    %c0_27 = arith.constant 0 : index
    %c0_28 = arith.constant 0 : index
    %36 = vector.load %arg8[%c0_27, %c0_28] : memref<16x128xf32, #tpu.memory_space<vmem>>, vector<16x128xf32>
    tpu.vector_store %arg8[%c0_27, %c0_28], %35 {strides = array<i32>} : memref<16x128xf32, #tpu.memory_space<vmem>>, vector<16x128xf32>,
    return
  }
  func.func @transform_0(%arg0: i32) -> (i32, i32) {
    %c0_i32 = arith.constant 0 : i32
    %c0_i32_0 = arith.constant 0 : i32
    return %arg0, %c0_i32 : i32, i32
  }
  func.func @transform_1(%arg0: i32) -> (i32, i32) {
    %c0_i32 = arith.constant 0 : i32
    %c0_i32_0 = arith.constant 0 : i32
    return %arg0, %c0_i32 : i32, i32
  }
  func.func @transform_2(%arg0: i32) -> (i32, i32) {
    %c0_i32 = arith.constant 0 : i32
    %c0_i32_0 = arith.constant 0 : i32
    return %arg0, %c0_i32 : i32, i32
  }
  func.func @transform_3(%arg0: i32) -> (i32, i32) {
    %c0_i32 = arith.constant 0 : i32
    %c0_i32_0 = arith.constant 0 : i32
    return %arg0, %c0_i32 : i32, i32
  }
  func.func @transform_4(%arg0: i32) -> (i32, i32) {
    %c0_i32 = arith.constant 0 : i32
    %c0_i32_0 = arith.constant 0 : i32
    %c0_i32_1 = arith.constant 0 : i32
    return %c0_i32, %c0_i32_0 : i32, i32
  }
  func.func @transform_5(%arg0: i32) -> (i32, i32, i32) {
    %c0_i32 = arith.constant 0 : i32
    %c0_i32_0 = arith.constant 0 : i32
    %c0_i32_1 = arith.constant 0 : i32
    %c0_i32_2 = arith.constant 0 : i32
    return %c0_i32, %c0_i32_0, %c0_i32_1 : i32, i32, i32
  }
  func.func @transform_6(%arg0: i32) -> (i32, i32) {
    %c0_i32 = arith.constant 0 : i32
    %c0_i32_0 = arith.constant 0 : i32
    %c0_i32_1 = arith.constant 0 : i32
    return %c0_i32, %c0_i32_0 : i32, i32
  }
  func.func @transform_7(%arg0: i32) -> (i32, i32) {
    %c0_i32 = arith.constant 0 : i32
    %c0_i32_0 = arith.constant 0 : i32
    return %arg0, %c0_i32 : i32, i32
  }
}

</mosaic_0001>

<llo_original>
// kernel: encoder_forward.1
$region0: #{encoder_forward.1}
  #allocation0 [shape = 'u32[]', space=smem, size = 0x4, offset = 0x4, fixed_abs, tag = 'smem constant byte address 0x4 - core index']
  #allocation1 [shape = 'u32[72,128]{1,0:T(1,128)}', space=vmem, size = 0x9000, scoped, tag = 'internal scratch']
  %s0 = inlined_call_operand.vmem [shape: bf16[32,24], index: 0, kind: input, shape index: {}]
  %s1 = inlined_call_operand.vmem [shape: bf16[32,128], index: 1, kind: input, shape index: {}]
  %s2 = inlined_call_operand.vmem [shape: bf16[32,24], index: 2, kind: input, shape index: {}]
  %s3 = inlined_call_operand.vmem [shape: bf16[32,128], index: 3, kind: input, shape index: {}]
  %s4 = inlined_call_operand.vmem [shape: bf16[24,128], index: 4, kind: input, shape index: {}]
  %s5 = inlined_call_operand.vmem [shape: bf16[3,128,128], index: 5, kind: input, shape index: {}]
  %s6 = inlined_call_operand.vmem [shape: f32[3,128], index: 6, kind: input, shape index: {}]
  %s7 = inlined_call_operand.vmem [shape: f32[32,128], index: 7, kind: output, shape index: {}]
  %s8 = sld [smem:[#allocation0]]
  $region61: #{encoder_forward.1} parent=0
    _
  %s10 = ssub.s32 1, %s8
  %s11 = scalar_select 0, %s10, %s8
  loop: start=0, step=1, limit=4
  $region2: #{encoder_forward.1} parent=0 // loop_pre_header
    _
  $region3: #{encoder_forward.1} parent=0 // loop_header
    %s13 = sphi 0, %s17
    %p14 = scmp.ge.s32.totalorder %s13, 4
    %s23 = sphi 0, %s25
    %s26 = sphi 0, %s23
    %s27 = sphi 0, %s26
    %s43 = sphi 0, %s27
    %s49 = sphi 0, %s51
    %s52 = sphi 0, %s49
    %s53 = sphi 0, %s52
    %s69 = sphi 0, %s53
    %s75 = sphi 0, %s77
    %s78 = sphi 0, %s75
    %s79 = sphi 0, %s78
    %s95 = sphi 0, %s79
    %s101 = sphi 0, %s103
    %s104 = sphi 0, %s101
    %s105 = sphi 0, %s104
    %s121 = sphi 0, %s105
    %s125 = sphi 0, %s125
    %s127 = sphi 0, %s125
    %s128 = sphi 0, %s127
    %s142 = sphi 0, %s128
    %s146 = sphi 0, %s146
    %s148 = sphi 0, %s146
    %s149 = sphi 0, %s148
    %s163 = sphi 0, %s149
    %s167 = sphi 0, %s167
    %s169 = sphi 0, %s167
    %s170 = sphi 0, %s169
    %s184 = sphi 0, %s170
    %s190 = sphi 0, %s192
    %s193 = sphi 0, %s190
    %s194 = sphi 0, %s193
    %s210 = sphi 0, %s194
  $region4: #{encoder_forward.1} parent=0 // loop_header_branch
    %16 = sbr.rel (%p14) target = $region8
  $region5: #{encoder_forward.1} parent=0 // loop_body
    %s18 = ssub.s32 %s13, 1
    %s19 = ssub.s32 %s13, 2
    %s20 = sadd.s32 %s13, 1
    %s21 = ssub.s32 %s13, %s20
    %p22 = scmp.eq.s32.totalorder %s21, 0
    %s24 = sadd.s32 %s23, 1
    %s25 = scalar_select %p22, %s23, %s24
    %p28 = pneg %p22
    %p29 = scmp.eq.s32.totalorder %s13, 1
    %p30 = por %p28, %p29
    %p31 = scmp.ne.s32.totalorder %s23, %s26
    %p32 = scmp.eq.s32.totalorder %s13, 0
    %p33 = por %p31, %p32
    %p34 = scmp.ne.s32.totalorder %s23, %s26
    %p35 = scmp.eq.s32.totalorder %s18, 1
    %p36 = por %p34, %p35
    %p37 = scmp.ne.s32.totalorder %s26, %s27
    %p38 = scmp.eq.s32.totalorder %s18, 0
    %p39 = por %p37, %p38
    %p40 = scmp.ne.s32.totalorder %s26, %s27
    %p41 = scmp.eq.s32.totalorder %s19, 1
    %p42 = por %p40, %p41
    %p44 = scmp.ne.s32.totalorder %s27, %s43
    %p45 = scmp.eq.s32.totalorder %s19, 0
    %p46 = por %p44, %p45
    %s47 = ssub.s32 %s13, %s20
    %p48 = scmp.eq.s32.totalorder %s47, 0
    %s50 = sadd.s32 %s49, 1
    %s51 = scalar_select %p48, %s49, %s50
    %p54 = pneg %p48
    %p55 = scmp.eq.s32.totalorder %s13, 1
    %p56 = por %p54, %p55
    %p57 = scmp.ne.s32.totalorder %s49, %s52
    %p58 = scmp.eq.s32.totalorder %s13, 0
    %p59 = por %p57, %p58
    %p60 = scmp.ne.s32.totalorder %s49, %s52
    %p61 = scmp.eq.s32.totalorder %s18, 1
    %p62 = por %p60, %p61
    %p63 = scmp.ne.s32.totalorder %s52, %s53
    %p64 = scmp.eq.s32.totalorder %s18, 0
    %p65 = por %p63, %p64
    %p66 = scmp.ne.s32.totalorder %s52, %s53
    %p67 = scmp.eq.s32.totalorder %s19, 1
    %p68 = por %p66, %p67
    %p70 = scmp.ne.s32.totalorder %s53, %s69
    %p71 = scmp.eq.s32.totalorder %s19, 0
    %p72 = por %p70, %p71
    %s73 = ssub.s32 %s13, %s20
    %p74 = scmp.eq.s32.totalorder %s73, 0
    %s76 = sadd.s32 %s75, 1
    %s77 = scalar_select %p74, %s75, %s76
    %p80 = pneg %p74
    %p81 = scmp.eq.s32.totalorder %s13, 1
    %p82 = por %p80, %p81
    %p83 = scmp.ne.s32.totalorder %s75, %s78
    %p84 = scmp.eq.s32.totalorder %s13, 0
    %p85 = por %p83, %p84
    %p86 = scmp.ne.s32.totalorder %s75, %s78
    %p87 = scmp.eq.s32.totalorder %s18, 1
    %p88 = por %p86, %p87
    %p89 = scmp.ne.s32.totalorder %s78, %s79
    %p90 = scmp.eq.s32.totalorder %s18, 0
    %p91 = por %p89, %p90
    %p92 = scmp.ne.s32.totalorder %s78, %s79
    %p93 = scmp.eq.s32.totalorder %s19, 1
    %p94 = por %p92, %p93
    %p96 = scmp.ne.s32.totalorder %s79, %s95
    %p97 = scmp.eq.s32.totalorder %s19, 0
    %p98 = por %p96, %p97
    %s99 = ssub.s32 %s13, %s20
    %p100 = scmp.eq.s32.totalorder %s99, 0
    %s102 = sadd.s32 %s101, 1
    %s103 = scalar_select %p100, %s101, %s102
    %p106 = pneg %p100
    %p107 = scmp.eq.s32.totalorder %s13, 1
    %p108 = por %p106, %p107
    %p109 = scmp.ne.s32.totalorder %s101, %s104
    %p110 = scmp.eq.s32.totalorder %s13, 0
    %p111 = por %p109, %p110
    %p112 = scmp.ne.s32.totalorder %s101, %s104
    %p113 = scmp.eq.s32.totalorder %s18, 1
    %p114 = por %p112, %p113
    %p115 = scmp.ne.s32.totalorder %s104, %s105
    %p116 = scmp.eq.s32.totalorder %s18, 0
    %p117 = por %p115, %p116
    %p118 = scmp.ne.s32.totalorder %s104, %s105
    %p119 = scmp.eq.s32.totalorder %s19, 1
    %p120 = por %p118, %p119
    %p122 = scmp.ne.s32.totalorder %s105, %s121
    %p123 = scmp.eq.s32.totalorder %s19, 0
    %p124 = por %p122, %p123
    %s126 = sadd.s32 %s125, 1
    %p129 = scmp.eq.s32.totalorder %s13, 1
    %p130 = scmp.ne.s32.totalorder %s125, %s127
    %p131 = scmp.eq.s32.totalorder %s13, 0
    %p132 = por %p130, %p131
    %p133 = scmp.ne.s32.totalorder %s125, %s127
    %p134 = scmp.eq.s32.totalorder %s18, 1
    %p135 = por %p133, %p134
    %p136 = scmp.ne.s32.totalorder %s127, %s128
    %p137 = scmp.eq.s32.totalorder %s18, 0
    %p138 = por %p136, %p137
    %p139 = scmp.ne.s32.totalorder %s127, %s128
    %p140 = scmp.eq.s32.totalorder %s19, 1
    %p141 = por %p139, %p140
    %p143 = scmp.ne.s32.totalorder %s128, %s142
    %p144 = scmp.eq.s32.totalorder %s19, 0
    %p145 = por %p143, %p144
    %s147 = sadd.s32 %s146, 1
    %p150 = scmp.eq.s32.totalorder %s13, 1
    %p151 = scmp.ne.s32.totalorder %s146, %s148
    %p152 = scmp.eq.s32.totalorder %s13, 0
    %p153 = por %p151, %p152
    %p154 = scmp.ne.s32.totalorder %s146, %s148
    %p155 = scmp.eq.s32.totalorder %s18, 1
    %p156 = por %p154, %p155
    %p157 = scmp.ne.s32.totalorder %s148, %s149
    %p158 = scmp.eq.s32.totalorder %s18, 0
    %p159 = por %p157, %p158
    %p160 = scmp.ne.s32.totalorder %s148, %s149
    %p161 = scmp.eq.s32.totalorder %s19, 1
    %p162 = por %p160, %p161
    %p164 = scmp.ne.s32.totalorder %s149, %s163
    %p165 = scmp.eq.s32.totalorder %s19, 0
    %p166 = por %p164, %p165
    %s168 = sadd.s32 %s167, 1
    %p171 = scmp.eq.s32.totalorder %s13, 1
    %p172 = scmp.ne.s32.totalorder %s167, %s169
    %p173 = scmp.eq.s32.totalorder %s13, 0
    %p174 = por %p172, %p173
    %p175 = scmp.ne.s32.totalorder %s167, %s169
    %p176 = scmp.eq.s32.totalorder %s18, 1
    %p177 = por %p175, %p176
    %p178 = scmp.ne.s32.totalorder %s169, %s170
    %p179 = scmp.eq.s32.totalorder %s18, 0
    %p180 = por %p178, %p179
    %p181 = scmp.ne.s32.totalorder %s169, %s170
    %p182 = scmp.eq.s32.totalorder %s19, 1
    %p183 = por %p181, %p182
    %p185 = scmp.ne.s32.totalorder %s170, %s184
    %p186 = scmp.eq.s32.totalorder %s19, 0
    %p187 = por %p185, %p186
    %s188 = ssub.s32 %s13, %s20
    %p189 = scmp.eq.s32.totalorder %s188, 0
    %s191 = sadd.s32 %s190, 1
    %s192 = scalar_select %p189, %s190, %s191
    %p195 = pneg %p189
    %p196 = scmp.eq.s32.totalorder %s13, 1
    %p197 = por %p195, %p196
    %p198 = scmp.ne.s32.totalorder %s190, %s193
    %p199 = scmp.eq.s32.totalorder %s13, 0
    %p200 = por %p198, %p199
    %p201 = scmp.ne.s32.totalorder %s190, %s193
    %p202 = scmp.eq.s32.totalorder %s18, 1
    %p203 = por %p201, %p202
    %p204 = scmp.ne.s32.totalorder %s193, %s194
    %p205 = scmp.eq.s32.totalorder %s18, 0
    %p206 = por %p204, %p205
    %p207 = scmp.ne.s32.totalorder %s193, %s194
    %p208 = scmp.eq.s32.totalorder %s19, 1
    %p209 = por %p207, %p208
    %p211 = scmp.ne.s32.totalorder %s194, %s210
    %p212 = scmp.eq.s32.totalorder %s19, 0
    %p213 = por %p211, %p212
    %p214 = scmp.le.s32.totalorder 1, %s13
    %p215 = scmp.lt.s32.totalorder %s13, 3
    %p216 = pnand %p214, %p215
    %p217 = pneg %p216
    // Predicated region
    $region9: #{encoder_forward.1} parent=5 // pred_check
      _
    $region10: #{encoder_forward.1} parent=5 // pred_check_branch
      %219 = sbr.rel (%p216) target = $region12
    $region11: #{encoder_forward.1} parent=5 // pred_region
      %s220 = ssub.s32 %s13, 1
      // Predicated region
      $region13: #{encoder_forward.1} parent=11 // pred_check
        %p221 = pneg %p138
      $region14: #{encoder_forward.1} parent=11 // pred_check_branch
        %223 = sbr.rel (%p221) target = $region16
      $region15: #{encoder_forward.1} parent=11 // pred_region
        _
      $region16: #{encoder_forward.1} parent=11 // pred_fallthru
        _
      // Predicated region
      $region17: #{encoder_forward.1} parent=11 // pred_check
        %p224 = pneg %p159
      $region18: #{encoder_forward.1} parent=11 // pred_check_branch
        %226 = sbr.rel (%p224) target = $region20
      $region19: #{encoder_forward.1} parent=11 // pred_region
        _
      $region20: #{encoder_forward.1} parent=11 // pred_fallthru
        _
      // Predicated region
      $region21: #{encoder_forward.1} parent=11 // pred_check
        %p227 = pneg %p180
      $region22: #{encoder_forward.1} parent=11 // pred_check_branch
        %229 = sbr.rel (%p227) target = $region24
      $region23: #{encoder_forward.1} parent=11 // pred_region
        _
      $region24: #{encoder_forward.1} parent=11 // pred_fallthru
        _
    $region12: #{encoder_forward.1} parent=5 // pred_fallthru
      _
    %p230 = scmp.lt.s32.totalorder %s13, 2
    // Predicated region
    $region25: #{encoder_forward.1} parent=5 // pred_check
      %p231 = pneg %p230
    $region26: #{encoder_forward.1} parent=5 // pred_check_branch
      %233 = sbr.rel (%p231) target = $region28
    $region27: #{encoder_forward.1} parent=5 // pred_region
      // Predicated region
      $region29: #{encoder_forward.1} parent=27 // pred_check
        %p234 = pneg %p33
      $region30: #{encoder_forward.1} parent=27 // pred_check_branch
        %236 = sbr.rel (%p234) target = $region32
      $region31: #{encoder_forward.1} parent=27 // pred_region
        %s237 = smul.u32 2, %s13
        %p238 = scmp.lt.s32.totalorder %s237, 3
        %s239 = scalar_select %p238, %s237, 3
        %s240 = smul.addr %s239, 4
        %s241 = scalar_lea.vmem %s0, %s240
        %s242 = smul.u32 2, %s13
      $region32: #{encoder_forward.1} parent=27 // pred_fallthru
        _
      // Predicated region
      $region33: #{encoder_forward.1} parent=27 // pred_check
        %p243 = pneg %p59
      $region34: #{encoder_forward.1} parent=27 // pred_check_branch
        %245 = sbr.rel (%p243) target = $region36
      $region35: #{encoder_forward.1} parent=27 // pred_region
        %s246 = smul.u32 2, %s13
        %p247 = scmp.lt.s32.totalorder %s246, 3
        %s248 = scalar_select %p247, %s246, 3
        %s249 = smul.addr %s248, 4
        %s250 = scalar_lea.vmem %s1, %s249
        %s251 = smul.u32 2, %s13
      $region36: #{encoder_forward.1} parent=27 // pred_fallthru
        _
      // Predicated region
      $region37: #{encoder_forward.1} parent=27 // pred_check
        %p252 = pneg %p85
      $region38: #{encoder_forward.1} parent=27 // pred_check_branch
        %254 = sbr.rel (%p252) target = $region40
      $region39: #{encoder_forward.1} parent=27 // pred_region
        %s255 = smul.u32 2, %s13
        %p256 = scmp.lt.s32.totalorder %s255, 3
        %s257 = scalar_select %p256, %s255, 3
        %s258 = smul.addr %s257, 4
        %s259 = scalar_lea.vmem %s2, %s258
        %s260 = smul.u32 2, %s13
      $region40: #{encoder_forward.1} parent=27 // pred_fallthru
        _
      // Predicated region
      $region41: #{encoder_forward.1} parent=27 // pred_check
        %p261 = pneg %p111
      $region42: #{encoder_forward.1} parent=27 // pred_check_branch
        %263 = sbr.rel (%p261) target = $region44
      $region43: #{encoder_forward.1} parent=27 // pred_region
        %s264 = smul.u32 2, %s13
        %p265 = scmp.lt.s32.totalorder %s264, 3
        %s266 = scalar_select %p265, %s264, 3
        %s267 = smul.addr %s266, 4
        %s268 = scalar_lea.vmem %s3, %s267
        %s269 = smul.u32 2, %s13
      $region44: #{encoder_forward.1} parent=27 // pred_fallthru
        _
    $region28: #{encoder_forward.1} parent=5 // pred_fallthru
      _
    %p270 = scmp.le.s32.totalorder 1, %s13
    %p271 = scmp.lt.s32.totalorder %s13, 3
    %p272 = pnand %p270, %p271
    %p273 = pneg %p272
    // Predicated region
    $region45: #{encoder_forward.1} parent=5 // pred_check
      _
    $region46: #{encoder_forward.1} parent=5 // pred_check_branch
      %275 = sbr.rel (%p272) target = $region48
    $region47: #{encoder_forward.1} parent=5 // pred_region
      %s276 = ssub.s32 %s13, 1
      %s277 = smul.u32 2, %s18
      %p278 = scmp.lt.s32.totalorder %s277, 3
      %s279 = scalar_select %p278, %s277, 3
      %s280 = smul.addr %s279, 4
      %s281 = scalar_lea.vmem %s0, %s280
      %p282 = pneg %p39
      %p283 = pneg %p36
      %s284 = smul.u32 2, %s18
      %p285 = scmp.lt.s32.totalorder %s284, 3
      %s286 = scalar_select %p285, %s284, 3
      %s287 = smul.addr %s286, 4
      %s288 = scalar_lea.vmem %s1, %s287
      %p289 = pneg %p65
      %p290 = pneg %p62
      %s291 = smul.u32 2, %s18
      %p292 = scmp.lt.s32.totalorder %s291, 3
      %s293 = scalar_select %p292, %s291, 3
      %s294 = smul.addr %s293, 4
      %s295 = scalar_lea.vmem %s2, %s294
      %p296 = pneg %p91
      %p297 = pneg %p88
      %s298 = smul.u32 2, %s18
      %p299 = scmp.lt.s32.totalorder %s298, 3
      %s300 = scalar_select %p299, %s298, 3
      %s301 = smul.addr %s300, 4
      %s302 = scalar_lea.vmem %s3, %s301
      %p303 = pneg %p117
      %p304 = pneg %p114
      %p305 = pneg %p138
      %p306 = pneg %p135
      %p307 = pneg %p159
      %p308 = pneg %p156
      %p309 = pneg %p180
      %p310 = pneg %p177
      %p311 = pneg %p206
      %p312 = pneg %p203
      %s313 = smul.u32 2, %s18
      %p314 = scmp.lt.s32.totalorder %s313, 3
      %s315 = scalar_select %p314, %s313, 3
      %s316 = smul.addr %s315, 8
      %s317 = scalar_lea.vmem %s7, %s316
      %s318 = smul.u32 2, %s18
      %p319 = scmp.lt.s32.totalorder %s318, 3
      %s320 = scalar_select %p319, %s318, 3
      %s321 = smul.addr %s320, 4
      %s322 = scalar_lea.vmem %s0, %s321
      %s323 = smul.u32 2, %s18
      %s324 = smul.u32 2, %s18
      %p325 = scmp.lt.s32.totalorder %s324, 3
      %s326 = scalar_select %p325, %s324, 3
      %s327 = smul.addr %s326, 4
      %s328 = scalar_lea.vmem %s1, %s327
      %s329 = smul.u32 2, %s18
      %s330 = smul.u32 2, %s18
      %p331 = scmp.lt.s32.totalorder %s330, 3
      %s332 = scalar_select %p331, %s330, 3
      %s333 = smul.addr %s332, 4
      %s334 = scalar_lea.vmem %s2, %s333
      %s335 = smul.u32 2, %s18
      %s336 = smul.u32 2, %s18
      %p337 = scmp.lt.s32.totalorder %s336, 3
      %s338 = scalar_select %p337, %s336, 3
      %s339 = smul.addr %s338, 4
      %s340 = scalar_lea.vmem %s3, %s339
      %s341 = smul.u32 2, %s18
      %s342 = smul.u32 2, %s18
      %p343 = scmp.lt.s32.totalorder %s342, 3
      %s344 = scalar_select %p343, %s342, 3
      %s345 = smul.addr %s344, 8
      %s346 = scalar_lea.vmem %s7, %s345
      %s347 = smul.u32 2, %s18
      %v349 = vld [vmem:[%s322] sm:$0xf]
      %v350 = vld [vmem:[%s322 + $0x4] sm:$0xf]
      %v351 = vld [vmem:[%s334] sm:$0xf]
      %v352 = vld [vmem:[%s334 + $0x4] sm:$0xf]
      %v355 = vunpack.c.l.b16 %v349
      %v356 = vunpack.c.l.b16 %v350
      %v357 = vpack.c.b16 %v356, %v355
      %v360 = vunpack.c.l.b16 %v351
      %v361 = vunpack.c.l.b16 %v352
      %v362 = vpack.c.b16 %v361, %v360
      %v363 = vld [vmem:[%s328] sm:$0xf]
      %v364 = vld [vmem:[%s328 + $0x4] sm:$0xf]
      %v365 = vld [vmem:[%s340] sm:$0xf]
      %v366 = vld [vmem:[%s340 + $0x4] sm:$0xf]
      %v369 = vunpack.c.l.b16 %v363
      %v370 = vunpack.c.l.b16 %v364
      %v371 = vpack.c.b16 %v370, %v369
      %v375 = vunpack.c.l.b16 %v365
      %v376 = vunpack.c.l.b16 %v366
      %v377 = vpack.c.b16 %v376, %v375
      %v379 = vld [vmem:[%s6] sm:$0x1]
      %v380 = vld [vmem:[%s6 + $0x1] sm:$0x1]
      %v381 = vld [vmem:[%s6 + $0x2] sm:$0x1]
      %v382 = vld [vmem:[%s4] sm:$0xf]
      %v383 = vld [vmem:[%s4 + $0x4] sm:$0xf]
      %v384 = vld [vmem:[%s4 + $0x8] sm:$0xf]
      %v385 = vld [vmem:[%s5] sm:$0xf]
      %v386 = vld [vmem:[%s5 + $0x4] sm:$0xf]
      %v387 = vld [vmem:[%s5 + $0x8] sm:$0xf]
      %v388 = vld [vmem:[%s5 + $0xc] sm:$0xf]
      %v389 = vld [vmem:[%s5 + $0x10] sm:$0xf]
      %v390 = vld [vmem:[%s5 + $0x14] sm:$0xf]
      %v391 = vld [vmem:[%s5 + $0x18] sm:$0xf]
      %v392 = vld [vmem:[%s5 + $0x1c] sm:$0xf]
      %v393 = vld [vmem:[%s5 + $0x20] sm:$0xf]
      %v394 = vld [vmem:[%s5 + $0x24] sm:$0xf]
      %v395 = vld [vmem:[%s5 + $0x28] sm:$0xf]
      %v396 = vld [vmem:[%s5 + $0x2c] sm:$0xf]
      %v397 = vld [vmem:[%s5 + $0x30] sm:$0xf]
      %v398 = vld [vmem:[%s5 + $0x34] sm:$0xf]
      %v399 = vld [vmem:[%s5 + $0x38] sm:$0xf]
      %v400 = vld [vmem:[%s5 + $0x3c] sm:$0xf]
      %v417 = vunpack.c.l.b16 %v385
      %v418 = vunpack.c.l.b16 %v386
      %v419 = vunpack.c.l.b16 %v387
      %v420 = vunpack.c.l.b16 %v388
      %v421 = vunpack.c.l.b16 %v389
      %v422 = vunpack.c.l.b16 %v390
      %v423 = vunpack.c.l.b16 %v391
      %v424 = vunpack.c.l.b16 %v392
      %v425 = vunpack.c.l.b16 %v393
      %v426 = vunpack.c.l.b16 %v394
      %v427 = vunpack.c.l.b16 %v395
      %v428 = vunpack.c.l.b16 %v396
      %v429 = vunpack.c.l.b16 %v397
      %v430 = vunpack.c.l.b16 %v398
      %v431 = vunpack.c.l.b16 %v399
      %v432 = vunpack.c.l.b16 %v400
      %v433 = vpack.c.b16 %v418, %v417
      %v434 = vpack.c.b16 %v420, %v419
      %v435 = vpack.c.b16 %v422, %v421
      %v436 = vpack.c.b16 %v424, %v423
      %v437 = vpack.c.b16 %v426, %v425
      %v438 = vpack.c.b16 %v428, %v427
      %v439 = vpack.c.b16 %v430, %v429
      %v440 = vpack.c.b16 %v432, %v431
      %449 = vmatpush.bf16.msra.mxu0 %v440
      %450 = vmatpush.bf16.msra.mxu0 %v439
      %451 = vmatpush.bf16.msra.mxu0 %v438
      %452 = vmatpush.bf16.msra.mxu0 %v437
      %453 = vmatpush.bf16.msra.mxu0 %v436
      %454 = vmatpush.bf16.msra.mxu0 %v435
      %455 = vmatpush.bf16.msra.mxu0 %v434
      %456 = vmatpush.bf16.msra.mxu0 %v433
      %457 = vmatmul.bf16.gmra.mxu0 %v371
      %v458 = vpop.f32.mrf.mxu0
      %v459 = vadd.f32 0.0, %v458
      %v460 = vpop.f32.mrf.mxu0
      %v461 = vadd.f32 0.0, %v460
      %462 = vmatmul.bf16.gmra.mxu0 %v377
      %v463 = vpop.f32.mrf.mxu0
      %v464 = vadd.f32 0.0, %v463
      %v465 = vpop.f32.mrf.mxu0
      %v466 = vadd.f32 0.0, %v465
      %467 = vdwg.mxu0
      %v471 = vunpack.c.l.b16 %v382
      %v472 = vunpack.c.l.b16 %v383
      %v473 = vunpack.c.l.b16 %v384
      %v474 = vpack.c.b16 %v472, %v471
      %v475 = vpack.c.b16 %v473, %v473
      %vm477 = vcmask 195584
      %v479 = vsel %vm477, %v357, 0
      %v482 = vsel %vm477, %v362, 0
      %vm484 = vcmask 1043456
      %v486 = vsel %vm484, %v475, 0
      %488 = vmatpush.bf16.msra.mxu0 0
      %489 = vmatpush.bf16.msra.mxu0 0
      %490 = vmatpush.bf16.msra.mxu0 0
      %491 = vmatpush.bf16.msra.mxu0 0
      %492 = vmatpush.bf16.msra.mxu0 0
      %493 = vmatpush.bf16.msra.mxu0 0
      %494 = vmatpush.bf16.msra.mxu0 %v486
      %495 = vmatpush.bf16.msra.mxu0 %v474
      %496 = vmatmul.bf16.gmra.mxu0 %v479
      %v497 = vpop.f32.mrf.mxu0
      %v498 = vadd.f32 %v459, %v497
      %v499 = vpop.f32.mrf.mxu0
      %v500 = vadd.f32 %v461, %v499
      %501 = vmatmul.bf16.gmra.mxu0 %v482
      %v502 = vpop.f32.mrf.mxu0
      %v503 = vadd.f32 %v464, %v502
      %v504 = vpop.f32.mrf.mxu0
      %v505 = vadd.f32 %v466, %v504
      %506 = vdwg.mxu0
      %v507 = vperm.slane %v379, 0
      %v508 = vadd.f32 %v498, %v507
      %v509 = vadd.f32 %v500, %v507
      %v510 = vadd.f32 %v503, %v507
      %v511 = vadd.f32 %v505, %v507
      %v512 = vmax.f32 %v508, 0.0
      %v513 = vmax.f32 %v509, 0.0
      %v514 = vmax.f32 %v510, 0.0
      %v515 = vmax.f32 %v511, 0.0
      %v516 = vpack.c.bf16 %v513, %v512
      %v517 = vpack.c.bf16 %v515, %v514
      %s518 = scalar_lea.vmem %s5, 64
      %v519 = vld [vmem:[%s518] sm:$0xf]
      %v520 = vld [vmem:[%s518 + $0x4] sm:$0xf]
      %v521 = vld [vmem:[%s518 + $0x8] sm:$0xf]
      %v522 = vld [vmem:[%s518 + $0xc] sm:$0xf]
      %v523 = vld [vmem:[%s518 + $0x10] sm:$0xf]
      %v524 = vld [vmem:[%s518 + $0x14] sm:$0xf]
      %v525 = vld [vmem:[%s518 + $0x18] sm:$0xf]
      %v526 = vld [vmem:[%s518 + $0x1c] sm:$0xf]
      %v527 = vld [vmem:[%s518 + $0x20] sm:$0xf]
      %v528 = vld [vmem:[%s518 + $0x24] sm:$0xf]
      %v529 = vld [vmem:[%s518 + $0x28] sm:$0xf]
      %v530 = vld [vmem:[%s518 + $0x2c] sm:$0xf]
      %v531 = vld [vmem:[%s518 + $0x30] sm:$0xf]
      %v532 = vld [vmem:[%s518 + $0x34] sm:$0xf]
      %v533 = vld [vmem:[%s518 + $0x38] sm:$0xf]
      %v534 = vld [vmem:[%s518 + $0x3c] sm:$0xf]
      %v535 = vperm.slane %v380, 0
      %v552 = vunpack.c.l.b16 %v519
      %v553 = vunpack.c.l.b16 %v520
      %v554 = vunpack.c.l.b16 %v521
      %v555 = vunpack.c.l.b16 %v522
      %v556 = vunpack.c.l.b16 %v523
      %v557 = vunpack.c.l.b16 %v524
      %v558 = vunpack.c.l.b16 %v525
      %v559 = vunpack.c.l.b16 %v526
      %v560 = vunpack.c.l.b16 %v527
      %v561 = vunpack.c.l.b16 %v528
      %v562 = vunpack.c.l.b16 %v529
      %v563 = vunpack.c.l.b16 %v530
      %v564 = vunpack.c.l.b16 %v531
      %v565 = vunpack.c.l.b16 %v532
      %v566 = vunpack.c.l.b16 %v533
      %v567 = vunpack.c.l.b16 %v534
      %v568 = vpack.c.b16 %v553, %v552
      %v569 = vpack.c.b16 %v555, %v554
      %v570 = vpack.c.b16 %v557, %v556
      %v571 = vpack.c.b16 %v559, %v558
      %v572 = vpack.c.b16 %v561, %v560
      %v573 = vpack.c.b16 %v563, %v562
      %v574 = vpack.c.b16 %v565, %v564
      %v575 = vpack.c.b16 %v567, %v566
      %584 = vmatpush.bf16.msra.mxu0 %v575
      %585 = vmatpush.bf16.msra.mxu0 %v574
      %586 = vmatpush.bf16.msra.mxu0 %v573
      %587 = vmatpush.bf16.msra.mxu0 %v572
      %588 = vmatpush.bf16.msra.mxu0 %v571
      %589 = vmatpush.bf16.msra.mxu0 %v570
      %590 = vmatpush.bf16.msra.mxu0 %v569
      %591 = vmatpush.bf16.msra.mxu0 %v568
      %592 = vmatmul.bf16.gmra.mxu0 %v516
      %v593 = vpop.f32.mrf.mxu0
      %v594 = vadd.f32 %v535, %v593
      %v595 = vpop.f32.mrf.mxu0
      %v596 = vadd.f32 %v535, %v595
      %597 = vmatmul.bf16.gmra.mxu0 %v517
      %v598 = vpop.f32.mrf.mxu0
      %v599 = vadd.f32 %v535, %v598
      %v600 = vpop.f32.mrf.mxu0
      %v601 = vadd.f32 %v535, %v600
      %602 = vdwg.mxu0
      %v603 = vmax.f32 %v594, 0.0
      %v604 = vmax.f32 %v596, 0.0
      %v605 = vmax.f32 %v599, 0.0
      %v606 = vmax.f32 %v601, 0.0
      %v607 = vpack.c.bf16 %v604, %v603
      %v608 = vpack.c.bf16 %v606, %v605
      %s609 = scalar_lea.vmem %s5, 128
      %v610 = vld [vmem:[%s609] sm:$0xf]
      %v611 = vld [vmem:[%s609 + $0x4] sm:$0xf]
      %v612 = vld [vmem:[%s609 + $0x8] sm:$0xf]
      %v613 = vld [vmem:[%s609 + $0xc] sm:$0xf]
      %v614 = vld [vmem:[%s609 + $0x10] sm:$0xf]
      %v615 = vld [vmem:[%s609 + $0x14] sm:$0xf]
      %v616 = vld [vmem:[%s609 + $0x18] sm:$0xf]
      %v617 = vld [vmem:[%s609 + $0x1c] sm:$0xf]
      %v618 = vld [vmem:[%s609 + $0x20] sm:$0xf]
      %v619 = vld [vmem:[%s609 + $0x24] sm:$0xf]
      %v620 = vld [vmem:[%s609 + $0x28] sm:$0xf]
      %v621 = vld [vmem:[%s609 + $0x2c] sm:$0xf]
      %v622 = vld [vmem:[%s609 + $0x30] sm:$0xf]
      %v623 = vld [vmem:[%s609 + $0x34] sm:$0xf]
      %v624 = vld [vmem:[%s609 + $0x38] sm:$0xf]
      %v625 = vld [vmem:[%s609 + $0x3c] sm:$0xf]
      %v626 = vperm.slane %v381, 0
      %v643 = vunpack.c.l.b16 %v610
      %v644 = vunpack.c.l.b16 %v611
      %v645 = vunpack.c.l.b16 %v612
      %v646 = vunpack.c.l.b16 %v613
      %v647 = vunpack.c.l.b16 %v614
      %v648 = vunpack.c.l.b16 %v615
      %v649 = vunpack.c.l.b16 %v616
      %v650 = vunpack.c.l.b16 %v617
      %v651 = vunpack.c.l.b16 %v618
      %v652 = vunpack.c.l.b16 %v619
      %v653 = vunpack.c.l.b16 %v620
      %v654 = vunpack.c.l.b16 %v621
      %v655 = vunpack.c.l.b16 %v622
      %v656 = vunpack.c.l.b16 %v623
      %v657 = vunpack.c.l.b16 %v624
      %v658 = vunpack.c.l.b16 %v625
      %v659 = vpack.c.b16 %v644, %v643
      %v660 = vpack.c.b16 %v646, %v645
      %v661 = vpack.c.b16 %v648, %v647
      %v662 = vpack.c.b16 %v650, %v649
      %v663 = vpack.c.b16 %v652, %v651
      %v664 = vpack.c.b16 %v654, %v653
      %v665 = vpack.c.b16 %v656, %v655
      %v666 = vpack.c.b16 %v658, %v657
      %675 = vmatpush.bf16.msra.mxu0 %v666
      %676 = vmatpush.bf16.msra.mxu0 %v665
      %677 = vmatpush.bf16.msra.mxu0 %v664
      %678 = vmatpush.bf16.msra.mxu0 %v663
      %679 = vmatpush.bf16.msra.mxu0 %v662
      %680 = vmatpush.bf16.msra.mxu0 %v661
      %681 = vmatpush.bf16.msra.mxu0 %v660
      %682 = vmatpush.bf16.msra.mxu0 %v659
      %683 = vmatmul.bf16.gmra.mxu0 %v607
      %v684 = vpop.f32.mrf.mxu0
      %v685 = vadd.f32 %v626, %v684
      %v686 = vpop.f32.mrf.mxu0
      %v687 = vadd.f32 %v626, %v686
      %688 = vmatmul.bf16.gmra.mxu0 %v608
      %v689 = vpop.f32.mrf.mxu0
      %v690 = vadd.f32 %v626, %v689
      %v691 = vpop.f32.mrf.mxu0
      %v692 = vadd.f32 %v626, %v691
      %693 = vdwg.mxu0
      %v694 = vadd.f32 %v685, %v690
      %v695 = vadd.f32 %v687, %v692
      %696 = vst [vmem:[%s346] sm:$0xff] %v694
      %697 = vst [vmem:[%s346 + $0x8] sm:$0xff] %v695
      %s698 = smul.u32 2, %s18
      %p699 = scmp.lt.s32.totalorder %s698, 3
      %s700 = scalar_select %p699, %s698, 3
      %s701 = smul.addr %s700, 8
      %s702 = scalar_lea.vmem %s7, %s701
      // Predicated region
      $region49: #{encoder_forward.1} parent=47 // pred_check
        %p703 = pneg %p203
      $region50: #{encoder_forward.1} parent=47 // pred_check_branch
        %705 = sbr.rel (%p703) target = $region52
      $region51: #{encoder_forward.1} parent=47 // pred_region
        %s706 = smul.u32 2, %s18
      $region52: #{encoder_forward.1} parent=47 // pred_fallthru
        _
    $region48: #{encoder_forward.1} parent=5 // pred_fallthru
      _
    %p707 = scmp.le.s32.totalorder 2, %s13
    // Predicated region
    $region53: #{encoder_forward.1} parent=5 // pred_check
      %p708 = pneg %p707
    $region54: #{encoder_forward.1} parent=5 // pred_check_branch
      %710 = sbr.rel (%p708) target = $region56
    $region55: #{encoder_forward.1} parent=5 // pred_region
      %s711 = ssub.s32 %s13, 2
      // Predicated region
      $region57: #{encoder_forward.1} parent=55 // pred_check
        %p712 = pneg %p209
      $region58: #{encoder_forward.1} parent=55 // pred_check_branch
        %714 = sbr.rel (%p712) target = $region60
      $region59: #{encoder_forward.1} parent=55 // pred_region
        %s715 = smul.u32 2, %s19
        %p716 = scmp.lt.s32.totalorder %s715, 3
        %s717 = scalar_select %p716, %s715, 3
        %s718 = smul.addr %s717, 8
        %s719 = scalar_lea.vmem %s7, %s718
      $region60: #{encoder_forward.1} parent=55 // pred_fallthru
        _
    $region56: #{encoder_forward.1} parent=5 // pred_fallthru
      _
  $region6: #{encoder_forward.1} parent=0 // loop_footer
    %s17 = sadd.s32 1, %s13
  $region7: #{encoder_forward.1} parent=0 // loop_footer_branch
    %12 = sbr.rel target = $region3
  $region8: #{encoder_forward.1} parent=0 // loop_exit
    _

</llo_original>
